<compile_context>
chip_gen: v5e
topology: v5e:2x2
jax: 0.10.0
libtpu: 0.0.40
codegen_flags: <defaults>
</compile_context>

<pallas_src>
from functools import partial

import jax
import jax.numpy as jnp
from jax.experimental import pallas as pl
from jax.experimental.pallas import tpu as pltpu

ALPHA = 1.0
GAMMA = 2.0
_LANES = 128


def _focal_ce_partial_kernel(logits_ref, targets_ref, partial_ref, *, n_total, tile_n):
    """Per-tile partial sum of per-sample cross entropy.

    logits_ref : (TILE_N, C) f32/bf16
    targets_ref: (TILE_N, 1) int32
    partial_ref: (1, 128) f32 -- tile partial sum broadcast across lanes (lane-dense write)
    """
    i = pl.program_id(0)

    logits = logits_ref[...].astype(jnp.float32)          # (TILE_N, C), f32 math
    tgt = targets_ref[...]                                 # (TILE_N, 1) int32
    tn, c = logits.shape

    # numerically stable per-sample cross entropy
    m = jnp.max(logits, axis=-1, keepdims=True)                                # (TILE_N, 1)
    lse = m + jnp.log(jnp.sum(jnp.exp(logits - m), axis=-1, keepdims=True))    # (TILE_N, 1)

    # (1, C) iota broadcast against the (TILE_N, 1) target column -- no (TILE_N, C)
    # int32 iota materialized per grid step.
    class_ids = jax.lax.broadcasted_iota(jnp.int32, (1, c), 1)                 # (1, C)
    target_logit = jnp.sum(jnp.where(class_ids == tgt, logits, 0.0),
                           axis=-1, keepdims=True)                             # (TILE_N, 1)

    per_sample = lse - target_logit                                            # (TILE_N, 1)

    # Mask rows past the true batch size (partial last block). Must remain a
    # select: out-of-bounds rows hold unspecified data (possible inf/NaN lse).
    row_ids = jax.lax.broadcasted_iota(jnp.int32, (tn, 1), 0) + i * tile_n
    per_sample = jnp.where(row_ids < n_total, per_sample, 0.0)

    tile_sum = jnp.sum(per_sample, axis=0, keepdims=True)                      # (1, 1)
    partial_ref[...] = jnp.broadcast_to(tile_sum, partial_ref.shape)


def _round_up(x, m):
    return ((x + m - 1) // m) * m


def _vmem_capacity_bytes():
    try:
        info = pltpu.get_tpu_info()
        return int(getattr(info, "vmem_capacity_bytes", 64 << 20))
    except Exception:
        return 64 << 20          # conservative (v7x-sized) fallback


def focal_loss(logits, targets, alpha=ALPHA, gamma=GAMMA, tile_n=None):
    """logits: (N, C) float (f32 or bf16, passed through as-is); targets: (N,) int classes."""
    n, c = logits.shape
    itemsize = jnp.dtype(logits.dtype).itemsize

    # --- real VMEM bytes per batch row, per buffer ---
    c_lanes = _round_up(c, _LANES)
    logits_row_vmem = c_lanes * itemsize          # lane-padded logits row
    targets_row_vmem = _LANES * 4                 # (TILE_N,1) int32 block lane-pads to 128
    row_vmem = logits_row_vmem + targets_row_vmem

    # --- per-generation budgets (per-TensorCore on v7x since the grid axis is "parallel") ---
    vmem_cap = _vmem_capacity_bytes()
    if vmem_cap <= (64 << 20):                    # v7x-class: 64 MiB per TC
        target_tile_bytes = 4 << 20
        vmem_limit_cap = 40 << 20
    else:                                         # v5e / v6e: 128 MiB physical VMEM
        target_tile_bytes = 14 << 20
        vmem_limit_cap = 96 << 20

    # --- tile sizing on real bytes/row; rows aligned to the native sublane tile ---
    row_multiple = max(8, 32 // itemsize)         # f32 -> 8, bf16 -> 16
    if tile_n is None:
        tile_n = target_tile_bytes // row_vmem
    tile_n = max(row_multiple, (int(tile_n) // row_multiple) * row_multiple)
    tile_n = min(tile_n, _round_up(n, row_multiple))

    num_tiles = pl.cdiv(n, tile_n)

    # NOTE: no jnp.pad of logits -- the in-kernel row mask handles the partial last
    # block. Targets are tiny; reshape to a column (plain XLA, outside the kernel).
    targets2d = targets.astype(jnp.int32).reshape(n, 1)

    # --- declared VMEM limit: double-buffered inputs + output tile + headroom ---
    per_buf = tile_n * row_vmem + 8 * _LANES * 4
    vmem_limit = int(min(max(2 * per_buf + (2 << 20), 16 << 20), vmem_limit_cap))

    kernel = partial(_focal_ce_partial_kernel, n_total=n, tile_n=tile_n)

    partials = pl.pallas_call(
        kernel,
        out_shape=jax.ShapeDtypeStruct((num_tiles, 1, _LANES), jnp.float32),
        grid_spec=pltpu.PrefetchScalarGridSpec(
            num_scalar_prefetch=0,
            grid=(num_tiles,),
            in_specs=[
                pl.BlockSpec((tile_n, c), lambda i: (i, 0)),
                pl.BlockSpec((tile_n, 1), lambda i: (i, 0)),
            ],
            out_specs=pl.BlockSpec((None, 1, _LANES), lambda i: (i, 0, 0)),
        ),
        compiler_params=pltpu.CompilerParams(
            dimension_semantics=("parallel",),
            vmem_limit_bytes=vmem_limit,
        ),
        cost_estimate=pl.CostEstimate(
            flops=5 * n * c,
            transcendentals=n * c,
            bytes_accessed=n * c * itemsize + n * 4 + num_tiles * _LANES * 4,
        ),
    )(logits, targets2d)

    # --- scalar epilogue in plain JAX ---
    # Matches the PyTorch module exactly: the focal factor multiplies the MEAN
    # cross entropy (a scalar), not per-sample losses.
    ce = jnp.sum(partials[:, 0, 0]) * (1.0 / n)
    pt = jnp.exp(-ce)
    one_minus_pt = 1.0 - pt
    if gamma == 2:                                   # static gamma=2: avoid float pow
        mod = one_minus_pt * one_minus_pt
    elif float(gamma) == int(gamma) and gamma >= 0:  # small integer gamma: multiply chain
        mod = jnp.ones_like(one_minus_pt)
        for _ in range(int(gamma)):
            mod = mod * one_minus_pt
    else:
        mod = one_minus_pt ** gamma
    return alpha * mod * ce


def focal_loss_ref(logits, targets, alpha=ALPHA, gamma=GAMMA):
    # pure-JAX reference (matches the torch module's semantics)
    lg = logits.astype(jnp.float32)
    lse = jax.nn.logsumexp(lg, axis=-1)
    tgt_logit = jnp.take_along_axis(lg, targets.astype(jnp.int32)[:, None], axis=-1)[:, 0]
    ce = jnp.mean(lse - tgt_logit)
    pt = jnp.exp(-ce)
    return alpha * (1.0 - pt) ** gamma * ce


if __name__ == "__main__":
    key = jax.random.PRNGKey(0)
    k1, k2, k3, k4, k5, k6 = jax.random.split(key, 6)

    # Test 1: small f32 batch, single exact tile (tile_n clamps to 8).
    N1, C1 = 8, 32
    logits1 = jax.random.normal(k1, (N1, C1), dtype=jnp.float32)
    targets1 = jax.random.randint(k2, (N1,), 0, C1, dtype=jnp.int32)
    out1 = jax.block_until_ready(focal_loss(logits1, targets1))
    ref1 = focal_loss_ref(logits1, targets1)
    assert jnp.allclose(out1, ref1, atol=1e-5, rtol=1e-5), (out1, ref1)

    # Test 2: N not a multiple of the tile -> non-divisible grid, no pad copy,
    # partial last block handled by the in-kernel row mask.
    N2, C2 = 24, 32
    logits2 = jax.random.normal(k3, (N2, C2), dtype=jnp.float32)
    targets2 = jax.random.randint(k4, (N2,), 0, C2, dtype=jnp.int32)
    out2 = jax.block_until_ready(focal_loss(logits2, targets2, tile_n=16))
    ref2 = focal_loss_ref(logits2, targets2)
    assert jnp.allclose(out2, ref2, atol=1e-5, rtol=1e-5), (out2, ref2)

    # Test 3: bf16 logits straight from the producer (no wrapper cast), multi-tile;
    # math stays f32 in-kernel.
    N3, C3 = 32, 128
    logits3 = jax.random.normal(k5, (N3, C3), dtype=jnp.float32).astype(jnp.bfloat16)
    targets3 = jax.random.randint(k6, (N3,), 0, C3, dtype=jnp.int32)
    out3 = jax.block_until_ready(focal_loss(logits3, targets3, tile_n=16))
    ref3 = focal_loss_ref(logits3, targets3)
    assert jnp.allclose(out3, ref3, atol=1e-4, rtol=1e-4), (out3, ref3)

    # TODO(synk): out-of-range targets / ignore_index are not handled (torch would raise);
    # invalid indices silently contribute target_logit = 0.
    print("KERNEL_OK")
</pallas_src>

<mosaic_0001>
module attributes {stable_mosaic.version = 11 : i64} {
  func.func @_focal_ce_partial_kernel(%arg0: i32, %arg1: memref<8x32xf32, #tpu.memory_space<vmem>>, %arg2: memref<8x1xi32, #tpu.memory_space<vmem>>, %arg3: memref<1x1x128xf32, #tpu.memory_space<vmem>>) attributes {dimension_semantics = [#tpu.dimension_semantics<parallel>], iteration_bounds = array<i64: 1>, scalar_prefetch = 0 : i64, scratch_operands = 0 : i64, tpu.core_type = #tpu.core_type<tc>, window_params = [{transform_indices = @transform_0, window_bounds = array<i64: 8, 32>}, {transform_indices = @transform_1, window_bounds = array<i64: 8, 1>}, {transform_indices = @transform_2, window_bounds = array<i64: 1, 1, 128>}]} {
    %c0 = arith.constant 0 : index
    %c0_0 = arith.constant 0 : index
    %0 = vector.load %arg1[%c0, %c0_0] : memref<8x32xf32, #tpu.memory_space<vmem>>, vector<8x32xf32>
    %c0_1 = arith.constant 0 : index
    %c0_2 = arith.constant 0 : index
    %1 = vector.load %arg2[%c0_1, %c0_2] : memref<8x1xi32, #tpu.memory_space<vmem>>, vector<8x1xi32>
    %cst = arith.constant dense<0xFF800000> : vector<8xf32>
    %2 = vector.multi_reduction <maximumf>, %0, %cst [1] : vector<8x32xf32> to vector<8xf32>
    %3 = vector.shape_cast %2 : vector<8xf32> to vector<8x1xf32>
    %4 = vector.broadcast %3 : vector<8x1xf32> to vector<8x32xf32>
    %5 = arith.subf %0, %4 : vector<8x32xf32>
    %6 = math.exp %5 : vector<8x32xf32>
    %cst_3 = arith.constant dense<0.000000e+00> : vector<8xf32>
    %7 = vector.multi_reduction <add>, %6, %cst_3 [1] : vector<8x32xf32> to vector<8xf32>
    %8 = vector.shape_cast %7 : vector<8xf32> to vector<8x1xf32>
    %9 = math.log %8 : vector<8x1xf32>
    %10 = arith.addf %3, %9 : vector<8x1xf32>
    %11 = tpu.iota {dimensions = array<i32: 1>} : vector<1x32xi32>
    %12 = vector.broadcast %11 : vector<1x32xi32> to vector<8x32xi32>
    %13 = vector.broadcast %1 : vector<8x1xi32> to vector<8x32xi32>
    %14 = arith.cmpi eq, %12, %13 : vector<8x32xi32>
    %cst_4 = arith.constant 0.000000e+00 : f32
    %15 = vector.broadcast %cst_4 : f32 to vector<8x32xf32>
    %16 = arith.select %14, %0, %15 : vector<8x32xi1>, vector<8x32xf32>
    %cst_5 = arith.constant dense<0.000000e+00> : vector<8xf32>
    %17 = vector.multi_reduction <add>, %16, %cst_5 [1] : vector<8x32xf32> to vector<8xf32>
    %18 = vector.shape_cast %17 : vector<8xf32> to vector<8x1xf32>
    %19 = arith.subf %10, %18 : vector<8x1xf32>
    %20 = tpu.iota {dimensions = array<i32: 0>} : vector<8x1xi32>
    %c8_i32 = arith.constant 8 : i32
    %21 = arith.muli %arg0, %c8_i32 : i32
    %22 = vector.broadcast %21 : i32 to vector<8x1xi32>
    %23 = arith.addi %20, %22 : vector<8x1xi32>
    %c8_i32_6 = arith.constant 8 : i32
    %24 = vector.broadcast %c8_i32_6 : i32 to vector<8x1xi32>
    %25 = arith.cmpi slt, %23, %24 : vector<8x1xi32>
    %cst_7 = arith.constant 0.000000e+00 : f32
    %26 = vector.broadcast %cst_7 : f32 to vector<8x1xf32>
    %27 = arith.select %25, %19, %26 : vector<8x1xi1>, vector<8x1xf32>
    %cst_8 = arith.constant dense<0.000000e+00> : vector<1xf32>
    %28 = vector.multi_reduction <add>, %27, %cst_8 [0] : vector<8x1xf32> to vector<1xf32>
    %29 = vector.shape_cast %28 : vector<1xf32> to vector<1x1xf32>
    %30 = vector.shape_cast %29 : vector<1x1xf32> to vector<1x1xf32>
    %31 = vector.broadcast %30 : vector<1x1xf32> to vector<1x128xf32>
    %c0_9 = arith.constant 0 : index
    %c0_10 = arith.constant 0 : index
    %c0_11 = arith.constant 0 : index
    %32 = vector.load %arg3[%c0_9, %c0_10, %c0_11] : memref<1x1x128xf32, #tpu.memory_space<vmem>>, vector<1x1x128xf32>
    %33 = vector.shape_cast %32 : vector<1x1x128xf32> to vector<1x128xf32>
    %34 = vector.shape_cast %31 : vector<1x128xf32> to vector<1x1x128xf32>
    tpu.vector_store %arg3[%c0_9, %c0_10, %c0_11], %34 {strides = array<i32>} : memref<1x1x128xf32, #tpu.memory_space<vmem>>, vector<1x1x128xf32>,
    return
  }
  func.func @transform_0(%arg0: i32) -> (i32, i32) {
    %c0_i32 = arith.constant 0 : i32
    %c0_i32_0 = arith.constant 0 : i32
    return %arg0, %c0_i32 : i32, i32
  }
  func.func @transform_1(%arg0: i32) -> (i32, i32) {
    %c0_i32 = arith.constant 0 : i32
    %c0_i32_0 = arith.constant 0 : i32
    return %arg0, %c0_i32 : i32, i32
  }
  func.func @transform_2(%arg0: i32) -> (i32, i32, i32) {
    %c0_i32 = arith.constant 0 : i32
    %c0_i32_0 = arith.constant 0 : i32
    %c0_i32_1 = arith.constant 0 : i32
    return %arg0, %c0_i32, %c0_i32_0 : i32, i32, i32
  }
}

</mosaic_0001>

<llo_original>
// kernel: tpu_custom_call.1
$region0: #{tpu_custom_call.1}
  #allocation0 [shape = 'u32[]', space=smem, size = 0x4, offset = 0x4, fixed_abs, tag = 'smem constant byte address 0x4 - core index']
  #allocation1 [shape = 'u32[72,128]{1,0:T(1,128)}', space=vmem, size = 0x9000, scoped, tag = 'internal scratch']
  %s0 = inlined_call_operand.vmem [shape: f32[8,32], index: 0, kind: input, shape index: {}]
  %s1 = inlined_call_operand.vmem [shape: s32[8,1], index: 1, kind: input, shape index: {}]
  %s2 = inlined_call_operand.hbm [shape: f32[1,1,128], index: 2, kind: output, shape index: {}]
  %s3 = sld [smem:[#allocation0]]
  $region18: #{tpu_custom_call.1} parent=0
    _
  %s5 = ssub.s32 1, %s3
  %s6 = scalar_select 0, %s5, %s3
  $region1: #{tpu_custom_call.1} parent=0
    #allocation2 [shape = 'u8[512]{0}', space=vmem, size = 0x400, scoped, tag = 'output window, operand 0, single buffered']
    #allocation3 [shape = 's32[1]{0}', space=sflag, size = 0x4, scoped, tag = 'scoped memory for tpu_custom_call.1']
    %7 = vsyncpa [#allocation3], 0
    // Predicated region
    $region2: #{tpu_custom_call.1} parent=1 // pred_check
      _
    $region3: #{tpu_custom_call.1} parent=1 // pred_check_branch
      %9 = sbr.rel (0) target = $region5
    $region4: #{tpu_custom_call.1} parent=1 // pred_region
      _
    $region5: #{tpu_custom_call.1} parent=1 // pred_fallthru
      _
    // Predicated region
    $region6: #{tpu_custom_call.1} parent=1 // pred_check
      _
    $region7: #{tpu_custom_call.1} parent=1 // pred_check_branch
      %11 = sbr.rel (0) target = $region9
    $region8: #{tpu_custom_call.1} parent=1 // pred_region
      _
    $region9: #{tpu_custom_call.1} parent=1 // pred_fallthru
      _
    %v12 = vld [vmem:[%s0] sm:$0xff]
    %v13 = vld [vmem:[%s1] sm:$0xff]
    %vm14 = vcmask 261120
    %v15 = vsel %vm14, %v12, -inf
    %16 = vmax.xlane.f32.xlu0 %v15
    %v17 = vpop.xlane.xlu0 %16
    %v18 = vsub.f32 %v12, %v17
    %v19 = vmul.f32 %v18, 1.442695
    %v20 = vpow.pop %v19
    %v21 = vsel %vm14, %v20, 0.0
    %22 = vadd.xlane.f32.xlu0 %v21
    %v23 = vpop.xlane.xlu0 %22
    %v24 = vlog2.pop %v23
    %v25 = vmul.f32 %v24, 0.6931472
    %v26 = vadd.f32 %v17, %v25
    %v27 = vlaneseq
    %v28 = vand.u32 %v27, 127
    %29 = vset.pattern.permute.xlu0 0
    %30 = vperm.xlu0 %29, %v13
    %v31 = vpop.permute.xlu0 %30
    %vm32 = vcmp.eq.s32.totalorder %v28, %v31
    %v33 = vsel %vm32, %v12, 0.0
    %v34 = vsel %vm14, %v33, 0.0
    %35 = vadd.xlane.f32.xlu0 %v34
    %v36 = vpop.xlane.xlu0 %35
    %v37 = vsub.f32 %v26, %v36
    %v38 = vlaneseq
    %v39 = vshrl.u32 %v38, 7
    %s40 = smul.u32 0, 8
    %v41 = vstv %s40
    %v42 = vadd.s32 %v39, %v41
    %vm43 = vcmp.lt.s32.totalorder %v42, 8
    %v44 = vsel %vm43, %v37, 0.0
    %v45 = vrot.slane %v44, 4
    %v46 = vadd.f32 %v44, %v45
    %v47 = vrot.slane %v46, 2
    %v48 = vadd.f32 %v46, %v47
    %v49 = vrot.slane %v48, 1
    %v50 = vadd.f32 %v48, %v49
    %51 = vst [vmem:[#allocation2] sm:$0x1] %v50
    // Predicated region
    $region10: #{tpu_custom_call.1} parent=1 // pred_check
      _
    $region11: #{tpu_custom_call.1} parent=1 // pred_check_branch
      %53 = sbr.rel (0) target = $region13
    $region12: #{tpu_custom_call.1} parent=1 // pred_region
      %55 = vsyncadd [#allocation3], 0
      %s57 = sshll.u32 [#allocation2], 4
      %s58 = int_to_ptr.vmem [resolvable:$true] %s57
      %s59 = sshll.u32 %s2, 4
      %s60 = int_to_ptr.hbm [resolvable:$true] %s59
      %62 = dma.vmem_to_hbm [thread:$0]  %s58, 16, %s60, [#allocation3]
    $region13: #{tpu_custom_call.1} parent=1 // pred_fallthru
      _
    // Predicated region
    $region14: #{tpu_custom_call.1} parent=1 // pred_check
      _
    $region15: #{tpu_custom_call.1} parent=1 // pred_check_branch
      %64 = sbr.rel (0) target = $region17
    $region16: #{tpu_custom_call.1} parent=1 // pred_region
      %66 = dma.done [#allocation3], 16
    $region17: #{tpu_custom_call.1} parent=1 // pred_fallthru
      _
    %67 = vsyncpa [#allocation3], 1

</llo_original>
